<compile_context>
chip_gen: v5e
topology: v5e:2x2
jax: 0.10.0
libtpu: 0.0.40
codegen_flags: <defaults>
</compile_context>

<pallas_src>
import jax
import jax.numpy as jnp
from jax import lax
from jax.experimental import pallas as pl
from jax.experimental.pallas import tpu as pltpu


# VMEM working-set budget / limit clamps — sized so tiles also fit v7x's
# 64 MiB per-TC VMEM (v5e/v6e have 128 MiB, so this is conservative there).
_VMEM_BUDGET_BYTES = 40 * 1024 * 1024
_VMEM_LIMIT_FLOOR = 16 * 1024 * 1024
_VMEM_LIMIT_CEIL = 56 * 1024 * 1024


# ----------------------------------------------------------------------------
# Tiling helpers
# ----------------------------------------------------------------------------

def _dtype_bytes(dt):
    return jnp.dtype(dt).itemsize


def _pick_kv_tile(lk, target=512):
    """KV tile: full extent if small, else the largest divisor of Lk <= target,
    preferring lane-dense (multiple-of-128) divisors."""
    if lk <= target:
        return lk
    divs = [d for d in range(1, target + 1) if lk % d == 0]
    lane_dense = [d for d in divs if d % 128 == 0]
    return max(lane_dense) if lane_dense else max(divs)


def _pick_batch_tile(b, batch_block):
    """Batch tile.  Default keeps >= 2 grid steps on the batch ('parallel')
    axis when B >= 2 so v7x's two TensorCores both get work."""
    if batch_block is not None:
        t = min(b, max(1, batch_block))
    else:
        t = max(1, b // 2) if b >= 2 else b
    while b % t:
        t -= 1
    return t


def _pick_q_chunk(lq, target=128):
    """Query-row chunk bounding the additive (QC, TK, H) tanh intermediate."""
    if lq <= target:
        return lq
    divs = [d for d in range(1, target + 1) if lq % d == 0]
    m8 = [d for d in divs if d % 8 == 0]
    return max(m8) if m8 else max(divs)


def _fit_tiles(b, tb, lk, tk, footprint, budget=_VMEM_BUDGET_BYTES):
    """Shrink (tb, tk) — kept as divisors of (B, Lk) — until the estimated
    per-step VMEM working set fits the budget."""
    kv_divs = [d for d in range(1, lk + 1) if lk % d == 0]
    b_divs = [d for d in range(1, b + 1) if b % d == 0]
    while footprint(tb, tk) > budget:
        b_smaller = [d for d in b_divs if d < tb]
        kv_smaller = [d for d in kv_divs if d < tk]
        if b_smaller:
            tb = max(b_smaller)
        elif kv_smaller:
            lane_dense = [d for d in kv_smaller if d % 128 == 0]
            tk = max(lane_dense) if lane_dense else max(kv_smaller)
        else:
            break
    return tb, tk


def _vmem_limit(footprint_bytes):
    est = int(footprint_bytes * 1.3) + (4 << 20)
    return int(min(max(est, _VMEM_LIMIT_FLOOR), _VMEM_LIMIT_CEIL))


def _q_spec(tb, lq, h):
    return pl.BlockSpec((tb, lq, h), lambda bi, kj: (bi, 0, 0))


def _k_spec(tb, tk, h):
    return pl.BlockSpec((tb, tk, h), lambda bi, kj: (bi, kj, 0))


def _param_spec(shape):
    nd = len(shape)
    return pl.BlockSpec(shape, lambda bi, kj: (0,) * nd)


def _out_spec(tb, lq, tk):
    return pl.BlockSpec((tb, lq, tk), lambda bi, kj: (bi, 0, kj))


def _compiler_params(vmem_bytes):
    # NOTE: the kv axis must stay the innermost, "arbitrary" (sequential) axis:
    # the cached query transforms in VMEM scratch rely on it.
    return pltpu.CompilerParams(
        dimension_semantics=("parallel", "arbitrary"),
        vmem_limit_bytes=vmem_bytes,
    )


# ----------------------------------------------------------------------------
# Kernels (factories close over static tile sizes / dtypes)
# ----------------------------------------------------------------------------

def _make_general_kernel(mxu_dtype):
    # scores = query @ key.transpose(1, 2)
    # TODO(synk): the PyTorch code also prints key.permute(0,1,3,2) (a 4-D
    # debug print that would fail on 3-D keys); the debug prints are omitted.
    def kernel(q_ref, k_ref, o_ref):
        q = q_ref[...].astype(mxu_dtype)                     # (tb, Lq, H)
        k = k_ref[...].astype(mxu_dtype)                     # (tb, TK, H)
        s = jnp.einsum("bqh,bkh->bqk", q, k,
                       preferred_element_type=jnp.float32)
        o_ref[...] = s.astype(o_ref.dtype)
    return kernel


def _make_multiplicative_kernel(mxu_dtype):
    # key_transformed = key @ W.T ; scores = query @ key_transformed.T
    # Re-associated as s = (q @ W) @ k^T: the kv-invariant query transform is
    # computed once per batch block as a single fused (tb*Lq, H) matmul and
    # cached in VMEM scratch (valid because kv is the innermost, sequential
    # grid axis).
    def kernel(q_ref, k_ref, w_ref, o_ref, qw_ref):
        kj = pl.program_id(1)
        tb, lq, h = q_ref.shape

        @pl.when(kj == 0)
        def _():
            q2 = q_ref[...].reshape(tb * lq, h).astype(mxu_dtype)
            w = w_ref[...].astype(mxu_dtype)                 # (H, H), (out, in)
            qw = lax.dot_general(q2, w, (((1,), (0,)), ((), ())),
                                 preferred_element_type=jnp.float32)
            qw_ref[...] = qw.reshape(tb, lq, h).astype(qw_ref.dtype)

        k = k_ref[...].astype(mxu_dtype)                     # (tb, TK, H)
        s = jnp.einsum("bqh,bkh->bqk", qw_ref[...], k,
                       preferred_element_type=jnp.float32)
        o_ref[...] = s.astype(o_ref.dtype)
    return kernel


def _make_additive_kernel(mxu_dtype, tanh_dtype, q_chunk):
    # scores[i, j] = v . tanh(W1 @ k_j + b1 + W2 @ q_i + b2)
    # Query transform: one fused (tb*Lq, H) matmul per batch block (pl.when),
    # cached in f32 scratch.  Key transform: one fused (tb*TK, H) matmul per
    # kv step.  The (QC, TK, H) tanh intermediate is bounded via kv tiling and
    # query-row chunking.
    def kernel(q_ref, k_ref, w1_ref, b1_ref, w2_ref, b2_ref, v_ref, o_ref,
               qt_ref, kt_ref, w1c_ref):
        kj = pl.program_id(1)
        tb, lq, h = q_ref.shape
        tk = k_ref.shape[1]

        @pl.when(kj == 0)
        def _():
            q2 = q_ref[...].reshape(tb * lq, h).astype(mxu_dtype)
            w2 = w2_ref[...].astype(mxu_dtype)               # (H, H)
            qt = lax.dot_general(q2, w2, (((1,), (1,)), ((), ())),
                                 preferred_element_type=jnp.float32)
            qt = qt + b2_ref[...]                            # (+ (1, H) bias)
            qt_ref[...] = qt.reshape(tb, lq, h)
            # Cast W1 once per batch block instead of every kv step.
            w1c_ref[...] = w1_ref[...].astype(w1c_ref.dtype)

        # Key transform for this kv block (single fused matmul).
        k2 = k_ref[...].reshape(tb * tk, h).astype(mxu_dtype)
        kt = lax.dot_general(k2, w1c_ref[...], (((1,), (1,)), ((), ())),
                             preferred_element_type=jnp.float32) + b1_ref[...]
        kt_ref[...] = kt.reshape(tb, tk, h).astype(kt_ref.dtype)

        v = v_ref[...].astype(tanh_dtype)                    # (1, H)
        n_chunks = lq // q_chunk
        total = tb * n_chunks

        def chunk_body(b, off):
            qt_c = qt_ref[b, pl.ds(off, q_chunk), :].astype(tanh_dtype)  # (QC, H)
            kt_b = kt_ref[b]                                             # (TK, H)
            t = jnp.tanh(qt_c[:, None, :] + kt_b[None, :, :])            # (QC, TK, H)
            s = jnp.sum(t * v[None, :, :], axis=-1)                      # (QC, TK)
            o_ref[b, pl.ds(off, q_chunk), :] = s.astype(o_ref.dtype)

        if total <= 8:
            # Small: fully static unroll (constant indices).
            for b in range(tb):
                for c in range(n_chunks):
                    chunk_body(b, c * q_chunk)
        else:
            def loop_body(idx, carry):
                b = idx // n_chunks
                c = idx - b * n_chunks
                chunk_body(b, pl.multiple_of(c * q_chunk, q_chunk))
                return carry
            lax.fori_loop(0, total, loop_body, 0)
    return kernel


# ----------------------------------------------------------------------------
# Wrappers
# ----------------------------------------------------------------------------

def general_attention(query, key, *, batch_block=None, kv_block=None,
                      mxu_dtype=jnp.bfloat16):
    B, Lq, H = query.shape
    _, Lk, _ = key.shape
    mxu_dtype = mxu_dtype or query.dtype
    in_b, mx_b, out_b = (_dtype_bytes(query.dtype), _dtype_bytes(mxu_dtype),
                         _dtype_bytes(query.dtype))

    tb0 = _pick_batch_tile(B, batch_block)
    tk0 = kv_block if kv_block is not None else _pick_kv_tile(Lk)
    assert Lk % tk0 == 0, "kv_block must divide Lk"

    def footprint(tb, tk):
        q_blk = tb * Lq * H * in_b
        k_blk = tb * tk * H * in_b
        o_blk = tb * Lq * tk * out_b
        temps = tb * Lq * H * mx_b + tb * tk * H * mx_b + tb * Lq * tk * 4
        return 2 * (q_blk + k_blk + o_blk) + temps

    tb, tk = _fit_tiles(B, tb0, Lk, tk0, footprint)
    grid = (B // tb, Lk // tk)
    return pl.pallas_call(
        _make_general_kernel(mxu_dtype),
        out_shape=jax.ShapeDtypeStruct((B, Lq, Lk), query.dtype),
        grid_spec=pltpu.PrefetchScalarGridSpec(
            num_scalar_prefetch=0,
            grid=grid,
            in_specs=[_q_spec(tb, Lq, H), _k_spec(tb, tk, H)],
            out_specs=_out_spec(tb, Lq, tk),
        ),
        compiler_params=_compiler_params(_vmem_limit(footprint(tb, tk))),
    )(query, key)


def multiplicative_attention(query, key, W, *, batch_block=None, kv_block=None,
                             mxu_dtype=jnp.bfloat16):
    B, Lq, H = query.shape
    _, Lk, _ = key.shape
    mxu_dtype = mxu_dtype or query.dtype
    in_b, mx_b, out_b = (_dtype_bytes(query.dtype), _dtype_bytes(mxu_dtype),
                         _dtype_bytes(query.dtype))

    tb0 = _pick_batch_tile(B, batch_block)
    tk0 = kv_block if kv_block is not None else _pick_kv_tile(Lk)
    assert Lk % tk0 == 0, "kv_block must divide Lk"

    def footprint(tb, tk):
        q_blk = tb * Lq * H * in_b
        k_blk = tb * tk * H * in_b
        o_blk = tb * Lq * tk * out_b
        w_bytes = H * H * _dtype_bytes(W.dtype)
        scratch = tb * Lq * H * mx_b
        temps = tb * tk * H * mx_b + tb * Lq * tk * 4 + H * H * mx_b
        return 2 * (q_blk + k_blk + o_blk) + 2 * w_bytes + scratch + temps

    tb, tk = _fit_tiles(B, tb0, Lk, tk0, footprint)
    grid = (B // tb, Lk // tk)
    return pl.pallas_call(
        _make_multiplicative_kernel(mxu_dtype),
        out_shape=jax.ShapeDtypeStruct((B, Lq, Lk), query.dtype),
        grid_spec=pltpu.PrefetchScalarGridSpec(
            num_scalar_prefetch=0,
            grid=grid,
            in_specs=[_q_spec(tb, Lq, H), _k_spec(tb, tk, H),
                      _param_spec(W.shape)],
            out_specs=_out_spec(tb, Lq, tk),
            scratch_shapes=[pltpu.VMEM((tb, Lq, H), mxu_dtype)],
        ),
        compiler_params=_compiler_params(_vmem_limit(footprint(tb, tk))),
    )(query, key, W)


def additive_attention(query, key, W1, b1, W2, b2, v, *, batch_block=None,
                       kv_block=None, mxu_dtype=jnp.bfloat16,
                       tanh_dtype=jnp.float32):
    # tanh_dtype: keep f32 on v5e (no bf16 EUP); pass jnp.bfloat16 on v6e/v7x
    # to halve the binding EUP workload and the rank-3 intermediate footprint.
    B, Lq, H = query.shape
    _, Lk, _ = key.shape
    mxu_dtype = mxu_dtype or query.dtype
    in_b = _dtype_bytes(query.dtype)
    mx_b = _dtype_bytes(mxu_dtype)
    cp_b = _dtype_bytes(tanh_dtype)
    out_b = _dtype_bytes(query.dtype)
    q_chunk = _pick_q_chunk(Lq)

    tb0 = _pick_batch_tile(B, batch_block)
    tk0 = kv_block if kv_block is not None else _pick_kv_tile(Lk, target=128)
    assert Lk % tk0 == 0, "kv_block must divide Lk"

    def footprint(tb, tk):
        q_blk = tb * Lq * H * in_b
        k_blk = tb * tk * H * in_b
        o_blk = tb * Lq * tk * out_b
        params = 3 * H * H * 4 + 3 * H * 4
        scratch = tb * Lq * H * 4 + tb * tk * H * cp_b + H * H * mx_b
        rank3 = 2 * tb * q_chunk * tk * H * cp_b          # tanh temp + product
        temps = tb * tk * H * 4 + tb * Lq * H * mx_b
        return 2 * (q_blk + k_blk + o_blk) + 2 * params + scratch + rank3 + temps

    tb, tk = _fit_tiles(B, tb0, Lk, tk0, footprint)
    grid = (B // tb, Lk // tk)
    return pl.pallas_call(
        _make_additive_kernel(mxu_dtype, tanh_dtype, q_chunk),
        out_shape=jax.ShapeDtypeStruct((B, Lq, Lk), query.dtype),
        grid_spec=pltpu.PrefetchScalarGridSpec(
            num_scalar_prefetch=0,
            grid=grid,
            in_specs=[
                _q_spec(tb, Lq, H),
                _k_spec(tb, tk, H),
                _param_spec(W1.shape),
                _param_spec(b1.shape),
                _param_spec(W2.shape),
                _param_spec(b2.shape),
                _param_spec(v.shape),
            ],
            out_specs=_out_spec(tb, Lq, tk),
            scratch_shapes=[
                pltpu.VMEM((tb, Lq, H), jnp.float32),   # cached query transform
                pltpu.VMEM((tb, tk, H), tanh_dtype),    # key transform (per kv step)
                pltpu.VMEM(W1.shape, mxu_dtype),        # W1 cast once per batch block
            ],
        ),
        compiler_params=_compiler_params(_vmem_limit(footprint(tb, tk))),
    )(query, key, W1, b1, W2, b2, v)


def attention_mechanisms_forward(query, key, params, attention_type="general",
                                 **kwargs):
    """Mirror of AttentionMechanisms.forward."""
    if attention_type == "general":
        return general_attention(query, key, **kwargs)
    elif attention_type == "multiplicative":
        return multiplicative_attention(query, key, params["W"], **kwargs)
    elif attention_type == "additive":
        return additive_attention(
            query, key,
            params["W1"], params["b1"],
            params["W2"], params["b2"],
            params["v"],
            **kwargs,
        )
    else:
        raise ValueError(
            "Invalid attention type. Choose from ['general', 'multiplicative', 'additive']"
        )


# ----------------------------------------------------------------------------
# Pure-JAX reference (for correctness checks)
# ----------------------------------------------------------------------------

def _ref_forward(query, key, params, attention_type):
    if attention_type == "general":
        return jnp.einsum("bqh,bkh->bqk", query, key)
    if attention_type == "multiplicative":
        kt = key @ params["W"].T
        return jnp.einsum("bqh,bkh->bqk", query, kt)
    if attention_type == "additive":
        qt = query @ params["W2"].T + params["b2"][0]     # (B, Lq, H)
        kt = key @ params["W1"].T + params["b1"][0]       # (B, Lk, H)
        t = jnp.tanh(qt[:, :, None, :] + kt[:, None, :, :])
        return jnp.einsum("bqkh,h->bqk", t, params["v"][0])
    raise ValueError(attention_type)


# ----------------------------------------------------------------------------
# Main
# ----------------------------------------------------------------------------

if __name__ == "__main__":
    B, Lq, Lk, H = 2, 8, 8, 32
    key0 = jax.random.PRNGKey(0)
    k_q, k_k, k_w, k_w1, k_b1, k_w2, k_b2, k_v = jax.random.split(key0, 8)

    query = jax.random.normal(k_q, (B, Lq, H), dtype=jnp.float32)
    key_t = jax.random.normal(k_k, (B, Lk, H), dtype=jnp.float32)

    # PyTorch nn.Linear weight convention: (out_features, in_features);
    # biases kept 2-D (1, H) for TPU layout.
    scale = 1.0 / jnp.sqrt(H)
    params = {
        "W":  jax.random.uniform(k_w,  (H, H), minval=-scale, maxval=scale, dtype=jnp.float32),
        "W1": jax.random.uniform(k_w1, (H, H), minval=-scale, maxval=scale, dtype=jnp.float32),
        "b1": jax.random.uniform(k_b1, (1, H), minval=-scale, maxval=scale, dtype=jnp.float32),
        "W2": jax.random.uniform(k_w2, (H, H), minval=-scale, maxval=scale, dtype=jnp.float32),
        "b2": jax.random.uniform(k_b2, (1, H), minval=-scale, maxval=scale, dtype=jnp.float32),
        "v":  jax.random.uniform(k_v,  (1, H), minval=-scale, maxval=scale, dtype=jnp.float32),
    }

    # Two numerics modes: exact f32 MXU operands (tight tolerance) and the
    # default bf16 MXU operands recommended for v6e/v7x (loose tolerance).
    modes = [
        ("f32-mxu", dict(mxu_dtype=jnp.float32), 1e-5, 1e-5),
        ("bf16-mxu", dict(), 5e-2, 5e-2),
    ]

    ok = True
    for attn_type in ("general", "multiplicative", "additive"):
        ref = _ref_forward(query, key_t, params, attn_type)
        for name, kw, atol, rtol in modes:
            out = attention_mechanisms_forward(query, key_t, params, attn_type, **kw)
            out = jax.block_until_ready(out)
            assert out.shape == (B, Lq, Lk), (attn_type, out.shape)
            if not jnp.allclose(out, ref, atol=atol, rtol=rtol):
                ok = False
                err = float(jnp.max(jnp.abs(out - ref)))
                print(f"MISMATCH in {attn_type} [{name}]: max err {err}")

    if ok:
        print("KERNEL_OK")
</pallas_src>

<mosaic_0001>
module attributes {stable_mosaic.version = 11 : i64} {
  func.func @kernel(%arg0: i32, %arg1: i32, %arg2: memref<1x8x32xf32, #tpu.memory_space<vmem>>, %arg3: memref<1x8x32xf32, #tpu.memory_space<vmem>>, %arg4: memref<1x8x8xf32, #tpu.memory_space<vmem>>) attributes {dimension_semantics = [#tpu.dimension_semantics<parallel>, #tpu.dimension_semantics<arbitrary>], iteration_bounds = array<i64: 2, 1>, scalar_prefetch = 0 : i64, scratch_operands = 0 : i64, tpu.core_type = #tpu.core_type<tc>, window_params = [{transform_indices = @transform_0, window_bounds = array<i64: 1, 8, 32>}, {transform_indices = @transform_1, window_bounds = array<i64: 1, 8, 32>}, {transform_indices = @transform_2, window_bounds = array<i64: 1, 8, 8>}]} {
    %c0 = arith.constant 0 : index
    %c0_0 = arith.constant 0 : index
    %c0_1 = arith.constant 0 : index
    %0 = vector.load %arg2[%c0, %c0_0, %c0_1] : memref<1x8x32xf32, #tpu.memory_space<vmem>>, vector<1x8x32xf32>
    %c0_2 = arith.constant 0 : index
    %c0_3 = arith.constant 0 : index
    %c0_4 = arith.constant 0 : index
    %1 = vector.load %arg3[%c0_2, %c0_3, %c0_4] : memref<1x8x32xf32, #tpu.memory_space<vmem>>, vector<1x8x32xf32>
    "tpu.trace_start"() <{level = 10 : i32, message = "bqh,bkh->bqk"}> : () -> ()
    %cst = arith.constant dense<0.000000e+00> : vector<1x8x8xf32>
    %2 = tpu.matmul %0, %1, %cst {dimension_numbers = #tpu.dot_dimension_numbers<[2], [2], [1], [1], [0, 0, 0, 1, 1, 1], [0], [0]>} : vector<1x8x32xf32>, vector<1x8x32xf32>, vector<1x8x8xf32> -> vector<1x8x8xf32>
    "tpu.trace_stop"() : () -> ()
    %c0_5 = arith.constant 0 : index
    %c0_6 = arith.constant 0 : index
    %c0_7 = arith.constant 0 : index
    %3 = vector.load %arg4[%c0_5, %c0_6, %c0_7] : memref<1x8x8xf32, #tpu.memory_space<vmem>>, vector<1x8x8xf32>
    tpu.vector_store %arg4[%c0_5, %c0_6, %c0_7], %2 {strides = array<i32>} : memref<1x8x8xf32, #tpu.memory_space<vmem>>, vector<1x8x8xf32>,
    return
  }
  func.func @transform_0(%arg0: i32, %arg1: i32) -> (i32, i32, i32) {
    %c0_i32 = arith.constant 0 : i32
    %c0_i32_0 = arith.constant 0 : i32
    %c0_i32_1 = arith.constant 0 : i32
    return %arg0, %c0_i32, %c0_i32_0 : i32, i32, i32
  }
  func.func @transform_1(%arg0: i32, %arg1: i32) -> (i32, i32, i32) {
    %c0_i32 = arith.constant 0 : i32
    %c0_i32_0 = arith.constant 0 : i32
    return %arg0, %arg1, %c0_i32 : i32, i32, i32
  }
  func.func @transform_2(%arg0: i32, %arg1: i32) -> (i32, i32, i32) {
    %c0_i32 = arith.constant 0 : i32
    %c0_i32_0 = arith.constant 0 : i32
    return %arg0, %c0_i32, %arg1 : i32, i32, i32
  }
}

</mosaic_0001>

<llo_original>
// kernel: tpu_custom_call.1
$region0: #{tpu_custom_call.1}
  #allocation0 [shape = 'u32[]', space=smem, size = 0x4, offset = 0x4, fixed_abs, tag = 'smem constant byte address 0x4 - core index']
  #allocation1 [shape = 'u32[72,128]{1,0:T(1,128)}', space=vmem, size = 0x9000, scoped, tag = 'internal scratch']
  %s0 = inlined_call_operand.hbm [shape: f32[2,8,32], index: 0, kind: input, shape index: {}]
  %s1 = inlined_call_operand.hbm [shape: f32[2,8,32], index: 1, kind: input, shape index: {}]
  %s2 = inlined_call_operand.hbm [shape: f32[2,8,8], index: 2, kind: output, shape index: {}]
  %s3 = sld [smem:[#allocation0]]
  $region49: #{tpu_custom_call.1} parent=0
    _
  %s5 = ssub.s32 1, %s3
  %s6 = scalar_select 0, %s5, %s3
  $region1: #{tpu_custom_call.1} parent=0
    #allocation2 [shape = 'u8[8192]{0}', space=vmem, size = 0x2000, scoped, tag = 'input window, operand 0']
    #allocation3 [shape = 's32[2]{0}', space=sflag, size = 0x8, scoped, tag = 'scoped memory for tpu_custom_call.1']
    #allocation4 [shape = 's32[2]{0}', space=sflag, size = 0x8, scoped, tag = 'scoped memory for tpu_custom_call.1']
    #allocation5 [shape = 'u8[8192]{0}', space=vmem, size = 0x2000, scoped, tag = 'input window, operand 1']
    #allocation6 [shape = 's32[2]{0}', space=sflag, size = 0x8, scoped, tag = 'scoped memory for tpu_custom_call.1']
    #allocation7 [shape = 'u8[8192]{0}', space=vmem, size = 0x2000, scoped, tag = 'output window, operand 0']
    %7 = vsyncpa [#allocation3], 0
    %s8 = scalar_lea.sflag [#allocation3], 1
    %9 = vsyncpa %s8, 0
    %10 = vsyncpa [#allocation6], 0
    %s11 = scalar_lea.sflag [#allocation6], 1
    %12 = vsyncpa %s11, 0
    %13 = vsyncpa [#allocation4], 0
    %s14 = scalar_lea.sflag [#allocation4], 1
    %15 = vsyncpa %s14, 0
    loop: start=0, step=1, limit=4
    $region2: #{tpu_custom_call.1} parent=1 // loop_pre_header
      _
    $region3: #{tpu_custom_call.1} parent=1 // loop_header
      %s17 = sphi 0, %s21
      %p18 = scmp.ge.s32.totalorder %s17, 4
      %s24 = sphi 0, %s36
      %s25 = sphi 0, %s32
      %s26 = sphi 0, %s24
      %s27 = sphi 0, %s25
      %s28 = sphi 0, %s26
      %s29 = sphi 0, %s27
      %s39 = sphi 0, %s41
      %s42 = sphi 0, %s39
      %s43 = sphi 0, %s42
      %s59 = sphi 0, %s43
      %s67 = sphi 0, %s69
      %s70 = sphi 0, %s67
      %s71 = sphi 0, %s70
      %s87 = sphi 0, %s71
      %s95 = sphi 0, %s97
      %s98 = sphi 0, %s95
      %s99 = sphi 0, %s98
      %s115 = sphi 0, %s99
    $region4: #{tpu_custom_call.1} parent=1 // loop_header_branch
      %20 = sbr.rel (%p18) target = $region8
    $region5: #{tpu_custom_call.1} parent=1 // loop_body
      %s22 = ssub.s32 %s17, 1
      %s23 = ssub.s32 %s17, 2
      %s30 = sadd.s32 1, %s25
      %p31 = scmp.ge.s32.totalorder %s30, 1
      %s32 = scalar_select %p31, 0, %s30
      %s33 = sadd.s32 1, %s24
      %s34 = scalar_select %p31, %s33, %s24
      %p35 = scmp.ge.s32.totalorder %s34, 2
      %s36 = scalar_select %p35, 0, %s34
      %s37 = ssub.s32 %s24, %s36
      %p38 = scmp.eq.s32.totalorder %s37, 0
      %s40 = sadd.s32 %s39, 1
      %s41 = scalar_select %p38, %s39, %s40
      %p44 = pneg %p38
      %p45 = scmp.eq.s32.totalorder %s17, 1
      %p46 = por %p44, %p45
      %p47 = scmp.ne.s32.totalorder %s39, %s42
      %p48 = scmp.eq.s32.totalorder %s17, 0
      %p49 = por %p47, %p48
      %p50 = scmp.ne.s32.totalorder %s39, %s42
      %p51 = scmp.eq.s32.totalorder %s22, 1
      %p52 = por %p50, %p51
      %p53 = scmp.ne.s32.totalorder %s42, %s43
      %p54 = scmp.eq.s32.totalorder %s22, 0
      %p55 = por %p53, %p54
      %p56 = scmp.ne.s32.totalorder %s42, %s43
      %p57 = scmp.eq.s32.totalorder %s23, 1
      %p58 = por %p56, %p57
      %p60 = scmp.ne.s32.totalorder %s43, %s59
      %p61 = scmp.eq.s32.totalorder %s23, 0
      %p62 = por %p60, %p61
      %s63 = ssub.s32 %s24, %s36
      %s64 = ssub.s32 %s25, %s32
      %s65 = sor.u32 %s63, %s64
      %p66 = scmp.eq.s32.totalorder %s65, 0
      %s68 = sadd.s32 %s67, 1
      %s69 = scalar_select %p66, %s67, %s68
      %p72 = pneg %p66
      %p73 = scmp.eq.s32.totalorder %s17, 1
      %p74 = por %p72, %p73
      %p75 = scmp.ne.s32.totalorder %s67, %s70
      %p76 = scmp.eq.s32.totalorder %s17, 0
      %p77 = por %p75, %p76
      %p78 = scmp.ne.s32.totalorder %s67, %s70
      %p79 = scmp.eq.s32.totalorder %s22, 1
      %p80 = por %p78, %p79
      %p81 = scmp.ne.s32.totalorder %s70, %s71
      %p82 = scmp.eq.s32.totalorder %s22, 0
      %p83 = por %p81, %p82
      %p84 = scmp.ne.s32.totalorder %s70, %s71
      %p85 = scmp.eq.s32.totalorder %s23, 1
      %p86 = por %p84, %p85
      %p88 = scmp.ne.s32.totalorder %s71, %s87
      %p89 = scmp.eq.s32.totalorder %s23, 0
      %p90 = por %p88, %p89
      %s91 = ssub.s32 %s24, %s36
      %s92 = ssub.s32 %s25, %s32
      %s93 = sor.u32 %s91, %s92
      %p94 = scmp.eq.s32.totalorder %s93, 0
      %s96 = sadd.s32 %s95, 1
      %s97 = scalar_select %p94, %s95, %s96
      %p100 = pneg %p94
      %p101 = scmp.eq.s32.totalorder %s17, 1
      %p102 = por %p100, %p101
      %p103 = scmp.ne.s32.totalorder %s95, %s98
      %p104 = scmp.eq.s32.totalorder %s17, 0
      %p105 = por %p103, %p104
      %p106 = scmp.ne.s32.totalorder %s95, %s98
      %p107 = scmp.eq.s32.totalorder %s22, 1
      %p108 = por %p106, %p107
      %p109 = scmp.ne.s32.totalorder %s98, %s99
      %p110 = scmp.eq.s32.totalorder %s22, 0
      %p111 = por %p109, %p110
      %p112 = scmp.ne.s32.totalorder %s98, %s99
      %p113 = scmp.eq.s32.totalorder %s23, 1
      %p114 = por %p112, %p113
      %p116 = scmp.ne.s32.totalorder %s99, %s115
      %p117 = scmp.eq.s32.totalorder %s23, 0
      %p118 = por %p116, %p117
      %p119 = scmp.le.s32.totalorder 1, %s17
      %p120 = scmp.lt.s32.totalorder %s17, 3
      %p121 = pnand %p119, %p120
      %p122 = pneg %p121
      // Predicated region
      $region9: #{tpu_custom_call.1} parent=5 // pred_check
        _
      $region10: #{tpu_custom_call.1} parent=5 // pred_check_branch
        %124 = sbr.rel (%p121) target = $region12
      $region11: #{tpu_custom_call.1} parent=5 // pred_region
        %s125 = ssub.s32 %s17, 1
      $region12: #{tpu_custom_call.1} parent=5 // pred_fallthru
        _
      %p126 = scmp.lt.s32.totalorder %s17, 2
      // Predicated region
      $region13: #{tpu_custom_call.1} parent=5 // pred_check
        %p127 = pneg %p126
      $region14: #{tpu_custom_call.1} parent=5 // pred_check_branch
        %129 = sbr.rel (%p127) target = $region16
      $region15: #{tpu_custom_call.1} parent=5 // pred_region
        // Predicated region
        $region17: #{tpu_custom_call.1} parent=15 // pred_check
          %p130 = pneg %p49
        $region18: #{tpu_custom_call.1} parent=15 // pred_check_branch
          %132 = sbr.rel (%p130) target = $region20
        $region19: #{tpu_custom_call.1} parent=15 // pred_region
          %s133 = sand.u32 %s39, 1
          %s134 = scalar_lea.sflag [#allocation3], %s133
          %s135 = sand.u32 %s39, 1
          %s136 = smul.addr %s135, 8
          %s137 = scalar_lea.vmem [#allocation2], %s136
          %139 = vsyncadd %s134, 0
          %s140 = smul.addr %s24, 8
          %s141 = scalar_lea.hbm %s0, %s140
          %s143 = sshll.u32 %s141, 4
          %s144 = int_to_ptr.hbm [resolvable:$true] %s143
          %s145 = sshll.u32 %s137, 4
          %s146 = int_to_ptr.vmem [resolvable:$true] %s145
          %148 = dma.hbm_to_vmem [thread:$0]  %s144, 128, %s146, %s134
        $region20: #{tpu_custom_call.1} parent=15 // pred_fallthru
          _
        // Predicated region
        $region21: #{tpu_custom_call.1} parent=15 // pred_check
          %p149 = pneg %p77
        $region22: #{tpu_custom_call.1} parent=15 // pred_check_branch
          %151 = sbr.rel (%p149) target = $region24
        $region23: #{tpu_custom_call.1} parent=15 // pred_region
          %s152 = sand.u32 %s67, 1
          %s153 = scalar_lea.sflag [#allocation6], %s152
          %s154 = sand.u32 %s67, 1
          %s155 = smul.addr %s154, 8
          %s156 = scalar_lea.vmem [#allocation5], %s155
          %158 = vsyncadd %s153, 0
          %s159 = sadd.s32 %s25, %s24
          %s160 = smul.addr %s159, 8
          %s161 = scalar_lea.hbm %s1, %s160
          %s163 = sshll.u32 %s161, 4
          %s164 = int_to_ptr.hbm [resolvable:$true] %s163
          %s165 = sshll.u32 %s156, 4
          %s166 = int_to_ptr.vmem [resolvable:$true] %s165
          %168 = dma.hbm_to_vmem [thread:$0]  %s164, 128, %s166, %s153
        $region24: #{tpu_custom_call.1} parent=15 // pred_fallthru
          _
      $region16: #{tpu_custom_call.1} parent=5 // pred_fallthru
        _
      %p169 = scmp.le.s32.totalorder 1, %s17
      %p170 = scmp.lt.s32.totalorder %s17, 3
      %p171 = pnand %p169, %p170
      %p172 = pneg %p171
      // Predicated region
      $region25: #{tpu_custom_call.1} parent=5 // pred_check
        _
      $region26: #{tpu_custom_call.1} parent=5 // pred_check_branch
        %174 = sbr.rel (%p171) target = $region28
      $region27: #{tpu_custom_call.1} parent=5 // pred_region
        %s175 = ssub.s32 %s17, 1
        %s176 = sand.u32 %s42, 1
        %s177 = scalar_lea.sflag [#allocation3], %s176
        %s178 = sand.u32 %s42, 1
        %s179 = smul.addr %s178, 8
        %s180 = scalar_lea.vmem [#allocation2], %s179
        // Predicated region
        $region29: #{tpu_custom_call.1} parent=27 // pred_check
          %p181 = pneg %p55
        $region30: #{tpu_custom_call.1} parent=27 // pred_check_branch
          %183 = sbr.rel (%p181) target = $region32
        $region31: #{tpu_custom_call.1} parent=27 // pred_region
          %185 = dma.done %s177, 128
        $region32: #{tpu_custom_call.1} parent=27 // pred_fallthru
          _
        %s186 = sand.u32 %s70, 1
        %s187 = scalar_lea.sflag [#allocation6], %s186
        %s188 = sand.u32 %s70, 1
        %s189 = smul.addr %s188, 8
        %s190 = scalar_lea.vmem [#allocation5], %s189
        // Predicated region
        $region33: #{tpu_custom_call.1} parent=27 // pred_check
          %p191 = pneg %p83
        $region34: #{tpu_custom_call.1} parent=27 // pred_check_branch
          %193 = sbr.rel (%p191) target = $region36
        $region35: #{tpu_custom_call.1} parent=27 // pred_region
          %195 = dma.done %s187, 128
        $region36: #{tpu_custom_call.1} parent=27 // pred_fallthru
          _
        %s196 = sand.u32 %s42, 1
        %s197 = scalar_lea.sflag [#allocation3], %s196
        %s198 = sand.u32 %s42, 1
        %s199 = smul.addr %s198, 8
        %s200 = scalar_lea.vmem [#allocation2], %s199
        %p201 = pneg %p55
        %p202 = pneg %p52
        %s203 = sand.u32 %s70, 1
        %s204 = scalar_lea.sflag [#allocation6], %s203
        %s205 = sand.u32 %s70, 1
        %s206 = smul.addr %s205, 8
        %s207 = scalar_lea.vmem [#allocation5], %s206
        %p208 = pneg %p83
        %p209 = pneg %p80
        %p210 = pneg %p111
        %p211 = pneg %p108
        %s212 = sand.u32 %s98, 1
        %s213 = scalar_lea.sflag [#allocation4], %s212
        %s214 = sand.u32 %s98, 1
        %s215 = smul.addr %s214, 8
        %s216 = scalar_lea.vmem [#allocation7], %s215
        %v217 = vld [vmem:[%s180] sm:$0xff]
        %v218 = vld [vmem:[%s190] sm:$0xff]
        %vm219 = vcmask 261120
        %v221 = vsel %vm219, %v217, 0
        %v224 = vsel %vm219, %v218, 0
        %226 = vmatpush.xpose.msra.mxu0 0.0
        %227 = vmatpush.xpose.msra.mxu0 0.0
        %228 = vmatpush.xpose.msra.mxu0 0.0
        %229 = vmatpush.xpose.msra.mxu0 0.0
        %230 = vmatpush.xpose.msra.mxu0 0.0
        %231 = vmatpush.xpose.msra.mxu0 0.0
        %232 = vmatpush.xpose.msra.mxu0 0.0
        %233 = vmatpush.xpose.msra.mxu0 0.0
        %234 = vmatpush.xpose.msra.mxu0 0.0
        %235 = vmatpush.xpose.msra.mxu0 0.0
        %236 = vmatpush.xpose.msra.mxu0 0.0
        %237 = vmatpush.xpose.msra.mxu0 0.0
        %238 = vmatpush.xpose.msra.mxu0 0.0
        %239 = vmatpush.xpose.msra.mxu0 0.0
        %240 = vmatpush.xpose.msra.mxu0 0.0
        %241 = vmatpush.xpose.msra.mxu0 %v224
        %242 = vmatmul.f32.gmra.mxu0 %v221
        %v243 = vpop.f32.mrf.mxu0
        %v244 = vadd.f32 0.0, %v243
        %245 = vdwg.mxu0
        %vm246 = vcmask 64512
        %247 = vst.msk [vmem:[%s216] sm:$0xff] %vm246, %v244
        %s248 = sand.u32 %s98, 1
        %s249 = scalar_lea.sflag [#allocation4], %s248
        %s250 = sand.u32 %s98, 1
        %s251 = smul.addr %s250, 8
        %s252 = scalar_lea.vmem [#allocation7], %s251
        // Predicated region
        $region37: #{tpu_custom_call.1} parent=27 // pred_check
          %p253 = pneg %p108
        $region38: #{tpu_custom_call.1} parent=27 // pred_check_branch
          %255 = sbr.rel (%p253) target = $region40
        $region39: #{tpu_custom_call.1} parent=27 // pred_region
          %257 = vsyncadd %s249, 0
          %s258 = sadd.s32 %s27, %s26
          %s259 = smul.addr %s258, 8
          %s260 = scalar_lea.hbm %s2, %s259
          %s262 = sshll.u32 %s252, 4
          %s263 = int_to_ptr.vmem [resolvable:$true] %s262
          %s264 = sshll.u32 %s260, 4
          %s265 = int_to_ptr.hbm [resolvable:$true] %s264
          %267 = dma.vmem_to_hbm [thread:$0]  %s263, 128, %s265, %s249
        $region40: #{tpu_custom_call.1} parent=27 // pred_fallthru
          _
      $region28: #{tpu_custom_call.1} parent=5 // pred_fallthru
        _
      %p268 = scmp.le.s32.totalorder 2, %s17
      // Predicated region
      $region41: #{tpu_custom_call.1} parent=5 // pred_check
        %p269 = pneg %p268
      $region42: #{tpu_custom_call.1} parent=5 // pred_check_branch
        %271 = sbr.rel (%p269) target = $region44
      $region43: #{tpu_custom_call.1} parent=5 // pred_region
        %s272 = ssub.s32 %s17, 2
        // Predicated region
        $region45: #{tpu_custom_call.1} parent=43 // pred_check
          %p273 = pneg %p114
        $region46: #{tpu_custom_call.1} parent=43 // pred_check_branch
          %275 = sbr.rel (%p273) target = $region48
        $region47: #{tpu_custom_call.1} parent=43 // pred_region
          %s276 = sand.u32 %s99, 1
          %s277 = scalar_lea.sflag [#allocation4], %s276
          %s278 = sand.u32 %s99, 1
          %s279 = smul.addr %s278, 8
          %s280 = scalar_lea.vmem [#allocation7], %s279
          %282 = dma.done %s277, 128
        $region48: #{tpu_custom_call.1} parent=43 // pred_fallthru
          _
      $region44: #{tpu_custom_call.1} parent=5 // pred_fallthru
        _
    $region6: #{tpu_custom_call.1} parent=1 // loop_footer
      %s21 = sadd.s32 1, %s17
    $region7: #{tpu_custom_call.1} parent=1 // loop_footer_branch
      %16 = sbr.rel target = $region3
    $region8: #{tpu_custom_call.1} parent=1 // loop_exit
      _
    %283 = vsyncpa [#allocation3], 1
    %s284 = scalar_lea.sflag [#allocation3], 1
    %285 = vsyncpa %s284, 1
    %286 = vsyncpa [#allocation6], 1
    %s287 = scalar_lea.sflag [#allocation6], 1
    %288 = vsyncpa %s287, 1
    %289 = vsyncpa [#allocation4], 1
    %s290 = scalar_lea.sflag [#allocation4], 1
    %291 = vsyncpa %s290, 1

</llo_original>
